<compile_context>
chip_gen: v7x
topology: tpu7x:2x2x1
jax: 0.10.0
libtpu: 0.0.40
codegen_flags: <defaults>
</compile_context>

<pallas_src>
import jax
import jax.numpy as jnp
from jax import lax
from jax.experimental import pallas as pl
from jax.experimental.pallas import tpu as pltpu


# ----------------------------- model dims (consistent with the module) ----------
DW = 300          # embedding dim (dw)
DH = 50           # hidden dim   (dh)
N_CLASSES = 4
N_WORDS = 100     # synthetic vocabulary size stand-in for len(words)
PAD = N_WORDS + 1
N_VOCAB = N_WORDS + 2

DH_PAD = 128      # hidden dim padded to full lane width
OUT_PAD = 128     # class dim padded to full lane width (sliced to 4 in the wrapper)
TT_MAX = 128      # max time tile (VMEM-safe on v5e/v6e/v7x: <= 8 MiB x double-buffer)


def _round_up(x, m):
    return ((x + m - 1) // m) * m


# ----------------------------- Pallas kernel ------------------------------------
def _make_rnn_kernel(TT, TB, nsplit, T_real, T_pad):
    """Builds a kernel specialized for this (time tile, batch tile, sub-tile split)."""
    SB = TB // nsplit
    needs_mask = (T_pad != T_real)

    def kernel(x_ref, whh_ref, wlin_ref, blin_ref, out_ref, h_ref):
        # x_ref:    (TT, TB, DH_PAD)  bf16  pre-projected inputs: emb[tok]@W_ih + b_ih + b_hh
        # whh_ref:  (DH_PAD, DH_PAD)  bf16  hidden->hidden weights (zero padded)
        # wlin_ref: (DH_PAD, OUT_PAD) bf16  classifier weights (zero padded)
        # blin_ref: (1, OUT_PAD)      f32   classifier bias (zero padded)
        # out_ref:  (TB, OUT_PAD)     f32   logits (written only on the last time block)
        # h_ref:    (TB, DH_PAD)      f32   VMEM scratch carrying h across time blocks
        t_blk = pl.program_id(1)

        @pl.when(t_blk == 0)
        def _():
            h_ref[...] = jnp.zeros_like(h_ref)

        w_hh = whh_ref[...]                 # resident bf16 (128,128) -> 8 vregs
        t0 = t_blk * TT

        def step(i, hs):
            x_t = x_ref[i].astype(jnp.float32)          # (TB, 128)
            if needs_mask:
                valid = (t0 + i) < T_real
            new = []
            for s in range(nsplit):
                h_s = hs[s]
                # x already contains x_t @ W_ih + b_ih + b_hh (folded in the wrapper),
                # so the serial dependence chain is one small bf16 matmul + tanh.
                acc = jnp.dot(h_s.astype(jnp.bfloat16), w_hh,
                              preferred_element_type=jnp.float32)
                h_n = jnp.tanh(x_t[s * SB:(s + 1) * SB, :] + acc)
                if needs_mask:
                    # tail timesteps (padded with PAD tokens) must not update h,
                    # because the folded biases make a PAD step non-neutral.
                    h_n = jnp.where(valid, h_n, h_s)
                new.append(h_n)
            return tuple(new)

        hs0 = tuple(h_ref[pl.ds(s * SB, SB), :] for s in range(nsplit))
        # Bounded unroll: scheduler visibility without blowing the 64-vreg file.
        hs = lax.fori_loop(0, TT, step, hs0, unroll=8)
        for s in range(nsplit):
            h_ref[pl.ds(s * SB, SB), :] = hs[s]

        @pl.when(t_blk == pl.num_programs(1) - 1)
        def _():
            out_ref[...] = (jnp.dot(h_ref[...].astype(jnp.bfloat16), wlin_ref[...],
                                    preferred_element_type=jnp.float32)
                            + blin_ref[...])

    return kernel


# ----------------------------- wrapper -------------------------------------------
def rnn_forward(tokens, params, h0=None):
    """tokens: (B, T) int32.  Returns logits (B, 4) float32."""
    # TODO(synk): nonzero initial hidden state h0 is not plumbed into the kernel
    # (the module's default call uses h=None); pure-JAX reference supports it.
    assert h0 is None
    emb, w_ih, w_hh, b_ih, b_hh, w_lin, b_lin = params
    B, T = tokens.shape

    # Fold the input projection + recurrent biases into the embedding table (f32),
    # then stream the pre-projected activations in bf16 (halves HBM traffic & VMEM).
    emb_proj = jnp.dot(emb, w_ih, preferred_element_type=jnp.float32) + (b_ih + b_hh)
    emb_proj = jnp.pad(emb_proj, ((0, 0), (0, DH_PAD - DH))).astype(jnp.bfloat16)

    # ---- batch tiling -----------------------------------------------------------
    # For B >= 32 force at least 2 batch blocks (TB multiple of 16 keeps bf16 tiling
    # clean and gives a 2-way in-kernel sub-tile split); on v7x the "parallel" batch
    # axis then shards across both TensorCores.
    if B >= 32:
        TB = min(128, _round_up(-(-B // 2), 16))
    else:
        TB = _round_up(B, 8)
    B_pad = _round_up(B, TB)
    num_b = B_pad // TB
    nsplit = 2 if (TB >= 16 and TB % 16 == 0) else 1

    # ---- time tiling ------------------------------------------------------------
    # Large time tiles (up to 128) amortize the ~0.35us/grid-step overhead; the last
    # block's tail is masked inside the kernel, so T need not divide the tile.
    num_t = -(-T // TT_MAX)
    TT = _round_up(-(-T // num_t), 8)
    T_pad = num_t * TT

    # Pad batch rows and tail timesteps with PAD tokens (rows discarded / steps masked).
    tok = jnp.pad(tokens, ((0, B_pad - B), (0, T_pad - T)), constant_values=PAD)

    # Time-major gather directly from the *projected* table: (T_pad, B_pad, 128) bf16.
    x = jnp.take(emb_proj, tok.T, axis=0)

    # Zero-padded bf16 weights -> lane-dense MXU tiles, fewer vmatmul passes than f32.
    w_hh_p = jnp.zeros((DH_PAD, DH_PAD), jnp.bfloat16).at[:DH, :DH].set(
        w_hh.astype(jnp.bfloat16))
    w_lin_p = jnp.zeros((DH_PAD, OUT_PAD), jnp.bfloat16).at[:DH, :N_CLASSES].set(
        w_lin.astype(jnp.bfloat16))
    b_lin_p = jnp.zeros((1, OUT_PAD), jnp.float32).at[:, :N_CLASSES].set(b_lin)

    kernel = _make_rnn_kernel(TT, TB, nsplit, T, T_pad)

    out = pl.pallas_call(
        kernel,
        out_shape=jax.ShapeDtypeStruct((B_pad, OUT_PAD), jnp.float32),
        grid_spec=pltpu.PrefetchScalarGridSpec(
            num_scalar_prefetch=0,
            grid=(num_b, num_t),
            in_specs=[
                pl.BlockSpec((TT, TB, DH_PAD), lambda b, t: (t, b, 0)),   # x (streamed bf16)
                pl.BlockSpec((DH_PAD, DH_PAD), lambda b, t: (0, 0)),      # w_hh
                pl.BlockSpec((DH_PAD, OUT_PAD), lambda b, t: (0, 0)),     # w_lin
                pl.BlockSpec((1, OUT_PAD), lambda b, t: (0, 0)),          # b_lin
            ],
            out_specs=pl.BlockSpec((TB, OUT_PAD), lambda b, t: (b, 0)),
            scratch_shapes=[pltpu.VMEM((TB, DH_PAD), jnp.float32)],       # hidden carry
        ),
        compiler_params=pltpu.CompilerParams(
            dimension_semantics=("parallel", "arbitrary"),
            vmem_limit_bytes=32 * 1024 * 1024,
        ),
    )(x, w_hh_p, w_lin_p, b_lin_p)

    return out[:B, :N_CLASSES]


# ----------------------------- pure-JAX reference (for a sanity check) ----------
def rnn_reference(tokens, params, h0=None):
    emb, w_ih, w_hh, b_ih, b_hh, w_lin, b_lin = params
    B, T = tokens.shape
    x = jnp.take(emb, tokens, axis=0)                  # (B, T, DW)
    h = jnp.zeros((B, DH), jnp.float32) if h0 is None else h0
    for t in range(T):
        h = jnp.tanh(x[:, t, :] @ w_ih + h @ w_hh + b_ih + b_hh)
    return h @ w_lin + b_lin


# ----------------------------- deterministic parameter init ---------------------
def init_params(key):
    k_emb, k_wih, k_whh, k_bih, k_bhh, k_wl, k_bl = jax.random.split(key, 7)

    emb = jax.random.normal(k_emb, (N_VOCAB, DW), jnp.float32)
    emb = emb.at[PAD].set(0.0)                         # padding_idx=PAD -> zero row

    bound_rnn = 1.0 / jnp.sqrt(DH)
    w_ih = jax.random.uniform(k_wih, (DW, DH), jnp.float32, -bound_rnn, bound_rnn)
    w_hh = jax.random.uniform(k_whh, (DH, DH), jnp.float32, -bound_rnn, bound_rnn)
    b_ih = jax.random.uniform(k_bih, (1, DH), jnp.float32, -bound_rnn, bound_rnn)
    b_hh = jax.random.uniform(k_bhh, (1, DH), jnp.float32, -bound_rnn, bound_rnn)

    bound_lin = 1.0 / jnp.sqrt(DH)
    w_lin = jax.random.uniform(k_wl, (DH, N_CLASSES), jnp.float32, -bound_lin, bound_lin)
    b_lin = jax.random.uniform(k_bl, (1, N_CLASSES), jnp.float32, -bound_lin, bound_lin)

    return emb, w_ih, w_hh, b_ih, b_hh, w_lin, b_lin


if __name__ == "__main__":
    key = jax.random.PRNGKey(0)
    k_params, k_tok1, k_tok2 = jax.random.split(key, 3)

    params = init_params(k_params)
    fwd = jax.jit(rnn_forward)

    # Case 1: tiny batch, T fits one time block exactly (also exercises padding_idx).
    B1, T1 = 2, 8
    tok1 = jax.random.randint(k_tok1, (B1, T1), 0, N_WORDS, dtype=jnp.int32)
    tok1 = tok1.at[1, -1].set(PAD)
    logits1 = fwd(tok1, params)
    jax.block_until_ready(logits1)
    assert logits1.shape == (B1, N_CLASSES)
    assert logits1.dtype == jnp.float32
    assert bool(jnp.all(jnp.isfinite(logits1)))
    ref1 = rnn_reference(tok1, params)
    assert bool(jnp.allclose(logits1, ref1, rtol=2e-2, atol=2e-2)), (logits1, ref1)

    # Case 2: exercises 2 batch blocks (megacore path), 2-way sub-tile interleave,
    # and the masked time tail (T=20 -> TT=24 with 4 masked steps).
    B2, T2 = 40, 20
    tok2 = jax.random.randint(k_tok2, (B2, T2), 0, N_WORDS, dtype=jnp.int32)
    logits2 = fwd(tok2, params)
    jax.block_until_ready(logits2)
    assert logits2.shape == (B2, N_CLASSES)
    assert bool(jnp.all(jnp.isfinite(logits2)))
    ref2 = rnn_reference(tok2, params)
    assert bool(jnp.allclose(logits2, ref2, rtol=2e-2, atol=2e-2)), (logits2, ref2)

    print("KERNEL_OK")
</pallas_src>

<mosaic_0001>
module attributes {stable_mosaic.version = 11 : i64} {
  func.func @kernel(%arg0: i32, %arg1: i32, %arg2: memref<8x8x128xbf16, #tpu.memory_space<vmem>>, %arg3: memref<128x128xbf16, #tpu.memory_space<vmem>>, %arg4: memref<128x128xbf16, #tpu.memory_space<vmem>>, %arg5: memref<1x128xf32, #tpu.memory_space<vmem>>, %arg6: memref<8x128xf32, #tpu.memory_space<vmem>>, %arg7: memref<8x128xf32, #tpu.memory_space<vmem>>) attributes {dimension_semantics = [#tpu.dimension_semantics<parallel>, #tpu.dimension_semantics<arbitrary>], iteration_bounds = array<i64: 1, 1>, scalar_prefetch = 0 : i64, scratch_operands = 1 : i64, tpu.core_type = #tpu.core_type<tc>, window_params = [{transform_indices = @transform_0, window_bounds = array<i64: 8, 8, 128>}, {pipeline_mode = #tpu.pipeline_mode<synchronous>, transform_indices = @transform_1, window_bounds = array<i64: 128, 128>}, {pipeline_mode = #tpu.pipeline_mode<synchronous>, transform_indices = @transform_2, window_bounds = array<i64: 128, 128>}, {pipeline_mode = #tpu.pipeline_mode<synchronous>, transform_indices = @transform_3, window_bounds = array<i64: 1, 128>}, {transform_indices = @transform_4, window_bounds = array<i64: 8, 128>}]} {
    %c0_i32 = arith.constant 0 : i32
    %0 = arith.cmpi eq, %arg1, %c0_i32 : i32
    %1 = arith.extui %0 : i1 to i32
    %c0_i32_0 = arith.constant 0 : i32
    %2 = arith.cmpi ne, %1, %c0_i32_0 : i32
    scf.if %2 {
      %cst_32 = arith.constant 0.000000e+00 : f32
      %73 = vector.broadcast %cst_32 : f32 to vector<8x128xf32>
      %c0_33 = arith.constant 0 : index
      %c0_34 = arith.constant 0 : index
      %74 = vector.load %arg7[%c0_33, %c0_34] : memref<8x128xf32, #tpu.memory_space<vmem>>, vector<8x128xf32>
      tpu.vector_store %arg7[%c0_33, %c0_34], %73 {strides = array<i32>} : memref<8x128xf32, #tpu.memory_space<vmem>>, vector<8x128xf32>,
    } else {
    }
    %c0 = arith.constant 0 : index
    %c0_1 = arith.constant 0 : index
    %3 = vector.load %arg3[%c0, %c0_1] : memref<128x128xbf16, #tpu.memory_space<vmem>>, vector<128x128xbf16>
    %c0_2 = arith.constant 0 : index
    %c0_3 = arith.constant 0 : index
    %4 = vector.load %arg7[%c0_2, %c0_3] : memref<8x128xf32, #tpu.memory_space<vmem>>, vector<8x128xf32>
    %c0_i32_4 = arith.constant 0 : i32
    %5 = arith.index_cast %c0_i32_4 : i32 to index
    %c0_5 = arith.constant 0 : index
    %c0_6 = arith.constant 0 : index
    %6 = vector.load %arg2[%5, %c0_5, %c0_6] : memref<8x8x128xbf16, #tpu.memory_space<vmem>>, vector<1x8x128xbf16>
    %7 = vector.shape_cast %6 : vector<1x8x128xbf16> to vector<8x128xbf16>
    %8 = arith.extf %7 : vector<8x128xbf16> to vector<8x128xf32>
    %9 = arith.truncf %4 : vector<8x128xf32> to vector<8x128xbf16>
    %cst = arith.constant dense<0.000000e+00> : vector<8x128xf32>
    %10 = tpu.matmul %9, %3, %cst {dimension_numbers = #tpu.dot_dimension_numbers<[1], [0], [0], [1], [0, 0, 1, 1], [], []>} : vector<8x128xbf16>, vector<128x128xbf16>, vector<8x128xf32> -> vector<8x128xf32>
    %11 = arith.addf %8, %10 : vector<8x128xf32>
    %12 = math.tanh %11 : vector<8x128xf32>
    %c1_i32 = arith.constant 1 : i32
    %13 = arith.index_cast %c1_i32 : i32 to index
    %c0_7 = arith.constant 0 : index
    %c0_8 = arith.constant 0 : index
    %14 = vector.load %arg2[%13, %c0_7, %c0_8] : memref<8x8x128xbf16, #tpu.memory_space<vmem>>, vector<1x8x128xbf16>
    %15 = vector.shape_cast %14 : vector<1x8x128xbf16> to vector<8x128xbf16>
    %16 = arith.extf %15 : vector<8x128xbf16> to vector<8x128xf32>
    %17 = arith.truncf %12 : vector<8x128xf32> to vector<8x128xbf16>
    %cst_9 = arith.constant dense<0.000000e+00> : vector<8x128xf32>
    %18 = tpu.matmul %17, %3, %cst_9 {dimension_numbers = #tpu.dot_dimension_numbers<[1], [0], [0], [1], [0, 0, 1, 1], [], []>} : vector<8x128xbf16>, vector<128x128xbf16>, vector<8x128xf32> -> vector<8x128xf32>
    %19 = arith.addf %16, %18 : vector<8x128xf32>
    %20 = math.tanh %19 : vector<8x128xf32>
    %c2_i32 = arith.constant 2 : i32
    %21 = arith.index_cast %c2_i32 : i32 to index
    %c0_10 = arith.constant 0 : index
    %c0_11 = arith.constant 0 : index
    %22 = vector.load %arg2[%21, %c0_10, %c0_11] : memref<8x8x128xbf16, #tpu.memory_space<vmem>>, vector<1x8x128xbf16>
    %23 = vector.shape_cast %22 : vector<1x8x128xbf16> to vector<8x128xbf16>
    %24 = arith.extf %23 : vector<8x128xbf16> to vector<8x128xf32>
    %25 = arith.truncf %20 : vector<8x128xf32> to vector<8x128xbf16>
    %cst_12 = arith.constant dense<0.000000e+00> : vector<8x128xf32>
    %26 = tpu.matmul %25, %3, %cst_12 {dimension_numbers = #tpu.dot_dimension_numbers<[1], [0], [0], [1], [0, 0, 1, 1], [], []>} : vector<8x128xbf16>, vector<128x128xbf16>, vector<8x128xf32> -> vector<8x128xf32>
    %27 = arith.addf %24, %26 : vector<8x128xf32>
    %28 = math.tanh %27 : vector<8x128xf32>
    %c3_i32 = arith.constant 3 : i32
    %29 = arith.index_cast %c3_i32 : i32 to index
    %c0_13 = arith.constant 0 : index
    %c0_14 = arith.constant 0 : index
    %30 = vector.load %arg2[%29, %c0_13, %c0_14] : memref<8x8x128xbf16, #tpu.memory_space<vmem>>, vector<1x8x128xbf16>
    %31 = vector.shape_cast %30 : vector<1x8x128xbf16> to vector<8x128xbf16>
    %32 = arith.extf %31 : vector<8x128xbf16> to vector<8x128xf32>
    %33 = arith.truncf %28 : vector<8x128xf32> to vector<8x128xbf16>
    %cst_15 = arith.constant dense<0.000000e+00> : vector<8x128xf32>
    %34 = tpu.matmul %33, %3, %cst_15 {dimension_numbers = #tpu.dot_dimension_numbers<[1], [0], [0], [1], [0, 0, 1, 1], [], []>} : vector<8x128xbf16>, vector<128x128xbf16>, vector<8x128xf32> -> vector<8x128xf32>
    %35 = arith.addf %32, %34 : vector<8x128xf32>
    %36 = math.tanh %35 : vector<8x128xf32>
    %c4_i32 = arith.constant 4 : i32
    %37 = arith.index_cast %c4_i32 : i32 to index
    %c0_16 = arith.constant 0 : index
    %c0_17 = arith.constant 0 : index
    %38 = vector.load %arg2[%37, %c0_16, %c0_17] : memref<8x8x128xbf16, #tpu.memory_space<vmem>>, vector<1x8x128xbf16>
    %39 = vector.shape_cast %38 : vector<1x8x128xbf16> to vector<8x128xbf16>
    %40 = arith.extf %39 : vector<8x128xbf16> to vector<8x128xf32>
    %41 = arith.truncf %36 : vector<8x128xf32> to vector<8x128xbf16>
    %cst_18 = arith.constant dense<0.000000e+00> : vector<8x128xf32>
    %42 = tpu.matmul %41, %3, %cst_18 {dimension_numbers = #tpu.dot_dimension_numbers<[1], [0], [0], [1], [0, 0, 1, 1], [], []>} : vector<8x128xbf16>, vector<128x128xbf16>, vector<8x128xf32> -> vector<8x128xf32>
    %43 = arith.addf %40, %42 : vector<8x128xf32>
    %44 = math.tanh %43 : vector<8x128xf32>
    %c5_i32 = arith.constant 5 : i32
    %45 = arith.index_cast %c5_i32 : i32 to index
    %c0_19 = arith.constant 0 : index
    %c0_20 = arith.constant 0 : index
    %46 = vector.load %arg2[%45, %c0_19, %c0_20] : memref<8x8x128xbf16, #tpu.memory_space<vmem>>, vector<1x8x128xbf16>
    %47 = vector.shape_cast %46 : vector<1x8x128xbf16> to vector<8x128xbf16>
    %48 = arith.extf %47 : vector<8x128xbf16> to vector<8x128xf32>
    %49 = arith.truncf %44 : vector<8x128xf32> to vector<8x128xbf16>
    %cst_21 = arith.constant dense<0.000000e+00> : vector<8x128xf32>
    %50 = tpu.matmul %49, %3, %cst_21 {dimension_numbers = #tpu.dot_dimension_numbers<[1], [0], [0], [1], [0, 0, 1, 1], [], []>} : vector<8x128xbf16>, vector<128x128xbf16>, vector<8x128xf32> -> vector<8x128xf32>
    %51 = arith.addf %48, %50 : vector<8x128xf32>
    %52 = math.tanh %51 : vector<8x128xf32>
    %c6_i32 = arith.constant 6 : i32
    %53 = arith.index_cast %c6_i32 : i32 to index
    %c0_22 = arith.constant 0 : index
    %c0_23 = arith.constant 0 : index
    %54 = vector.load %arg2[%53, %c0_22, %c0_23] : memref<8x8x128xbf16, #tpu.memory_space<vmem>>, vector<1x8x128xbf16>
    %55 = vector.shape_cast %54 : vector<1x8x128xbf16> to vector<8x128xbf16>
    %56 = arith.extf %55 : vector<8x128xbf16> to vector<8x128xf32>
    %57 = arith.truncf %52 : vector<8x128xf32> to vector<8x128xbf16>
    %cst_24 = arith.constant dense<0.000000e+00> : vector<8x128xf32>
    %58 = tpu.matmul %57, %3, %cst_24 {dimension_numbers = #tpu.dot_dimension_numbers<[1], [0], [0], [1], [0, 0, 1, 1], [], []>} : vector<8x128xbf16>, vector<128x128xbf16>, vector<8x128xf32> -> vector<8x128xf32>
    %59 = arith.addf %56, %58 : vector<8x128xf32>
    %60 = math.tanh %59 : vector<8x128xf32>
    %c7_i32 = arith.constant 7 : i32
    %61 = arith.index_cast %c7_i32 : i32 to index
    %c0_25 = arith.constant 0 : index
    %c0_26 = arith.constant 0 : index
    %62 = vector.load %arg2[%61, %c0_25, %c0_26] : memref<8x8x128xbf16, #tpu.memory_space<vmem>>, vector<1x8x128xbf16>
    %63 = vector.shape_cast %62 : vector<1x8x128xbf16> to vector<8x128xbf16>
    %64 = arith.extf %63 : vector<8x128xbf16> to vector<8x128xf32>
    %65 = arith.truncf %60 : vector<8x128xf32> to vector<8x128xbf16>
    %cst_27 = arith.constant dense<0.000000e+00> : vector<8x128xf32>
    %66 = tpu.matmul %65, %3, %cst_27 {dimension_numbers = #tpu.dot_dimension_numbers<[1], [0], [0], [1], [0, 0, 1, 1], [], []>} : vector<8x128xbf16>, vector<128x128xbf16>, vector<8x128xf32> -> vector<8x128xf32>
    %67 = arith.addf %64, %66 : vector<8x128xf32>
    %68 = math.tanh %67 : vector<8x128xf32>
    %c8_i32 = arith.constant 8 : i32
    %c0_28 = arith.constant 0 : index
    %c0_29 = arith.constant 0 : index
    %69 = vector.load %arg7[%c0_28, %c0_29] : memref<8x128xf32, #tpu.memory_space<vmem>>, vector<8x128xf32>
    tpu.vector_store %arg7[%c0_28, %c0_29], %68 {strides = array<i32>} : memref<8x128xf32, #tpu.memory_space<vmem>>, vector<8x128xf32>,
    %c0_i32_30 = arith.constant 0 : i32
    %70 = arith.cmpi eq, %arg1, %c0_i32_30 : i32
    %71 = arith.extui %70 : i1 to i32
    %c0_i32_31 = arith.constant 0 : i32
    %72 = arith.cmpi ne, %71, %c0_i32_31 : i32
    scf.if %72 {
      %c0_32 = arith.constant 0 : index
      %c0_33 = arith.constant 0 : index
      %73 = vector.load %arg7[%c0_32, %c0_33] : memref<8x128xf32, #tpu.memory_space<vmem>>, vector<8x128xf32>
      %74 = arith.truncf %73 : vector<8x128xf32> to vector<8x128xbf16>
      %c0_34 = arith.constant 0 : index
      %c0_35 = arith.constant 0 : index
      %75 = vector.load %arg4[%c0_34, %c0_35] : memref<128x128xbf16, #tpu.memory_space<vmem>>, vector<128x128xbf16>
      %cst_36 = arith.constant dense<0.000000e+00> : vector<8x128xf32>
      %76 = tpu.matmul %74, %75, %cst_36 {dimension_numbers = #tpu.dot_dimension_numbers<[1], [0], [0], [1], [0, 0, 1, 1], [], []>} : vector<8x128xbf16>, vector<128x128xbf16>, vector<8x128xf32> -> vector<8x128xf32>
      %c0_37 = arith.constant 0 : index
      %c0_38 = arith.constant 0 : index
      %77 = vector.load %arg5[%c0_37, %c0_38] : memref<1x128xf32, #tpu.memory_space<vmem>>, vector<1x128xf32>
      %78 = vector.broadcast %77 : vector<1x128xf32> to vector<8x128xf32>
      %79 = arith.addf %76, %78 : vector<8x128xf32>
      %c0_39 = arith.constant 0 : index
      %c0_40 = arith.constant 0 : index
      %80 = vector.load %arg6[%c0_39, %c0_40] : memref<8x128xf32, #tpu.memory_space<vmem>>, vector<8x128xf32>
      tpu.vector_store %arg6[%c0_39, %c0_40], %79 {strides = array<i32>} : memref<8x128xf32, #tpu.memory_space<vmem>>, vector<8x128xf32>,
    } else {
    }
    return
  }
  func.func @transform_0(%arg0: i32, %arg1: i32) -> (i32, i32, i32) {
    %c0_i32 = arith.constant 0 : i32
    %c0_i32_0 = arith.constant 0 : i32
    return %arg1, %arg0, %c0_i32 : i32, i32, i32
  }
  func.func @transform_1(%arg0: i32, %arg1: i32) -> (i32, i32) {
    %c0_i32 = arith.constant 0 : i32
    %c0_i32_0 = arith.constant 0 : i32
    %c0_i32_1 = arith.constant 0 : i32
    return %c0_i32, %c0_i32_0 : i32, i32
  }
  func.func @transform_2(%arg0: i32, %arg1: i32) -> (i32, i32) {
    %c0_i32 = arith.constant 0 : i32
    %c0_i32_0 = arith.constant 0 : i32
    %c0_i32_1 = arith.constant 0 : i32
    return %c0_i32, %c0_i32_0 : i32, i32
  }
  func.func @transform_3(%arg0: i32, %arg1: i32) -> (i32, i32) {
    %c0_i32 = arith.constant 0 : i32
    %c0_i32_0 = arith.constant 0 : i32
    %c0_i32_1 = arith.constant 0 : i32
    return %c0_i32, %c0_i32_0 : i32, i32
  }
  func.func @transform_4(%arg0: i32, %arg1: i32) -> (i32, i32) {
    %c0_i32 = arith.constant 0 : i32
    %c0_i32_0 = arith.constant 0 : i32
    return %arg0, %c0_i32 : i32, i32
  }
}

</mosaic_0001>

<llo_original>
// kernel: rnn_forward.1
$region0: #{rnn_forward.1}
  #allocation0 [shape = 'u32[]', space=smem, size = 0x4, offset = 0x4, fixed_abs, tag = 'smem constant byte address 0x4 - core index']
  #allocation1 [shape = 'u32[144,128]{1,0:T(1,128)}', space=vmem, size = 0x12000, scoped, tag = 'internal scratch']
  #allocation2 [shape = 'f32[8,128]{1,0:T(8,128)}', space=vmem, size = 0x1000, scoped, tag = 'scratch operand']
  %s0 = inlined_call_operand.vmem [shape: bf16[8,8,128], index: 0, kind: input, shape index: {}]
  %s1 = inlined_call_operand.vmem [shape: bf16[128,128], index: 1, kind: input, shape index: {}]
  %s2 = inlined_call_operand.vmem [shape: bf16[128,128], index: 2, kind: input, shape index: {}]
  %s3 = inlined_call_operand.vmem [shape: f32[1,128], index: 3, kind: input, shape index: {}]
  %s4 = inlined_call_operand.vmem [shape: f32[8,128], index: 4, kind: output, shape index: {}]
  %s5 = sld [smem:[#allocation0]]
  $region34: #{rnn_forward.1} parent=0
    _
  %s7 = ssub.s32 1, %s5
  %s8 = scalar_select 0, %s7, %s5
  // Predicated region
  $region2: #{rnn_forward.1} parent=0 // pred_check
    _
  $region3: #{rnn_forward.1} parent=0 // pred_check_branch
    %10 = sbr.rel (0) target = $region5
  $region4: #{rnn_forward.1} parent=0 // pred_region
    _
  $region5: #{rnn_forward.1} parent=0 // pred_fallthru
    _
  // Predicated region
  $region6: #{rnn_forward.1} parent=0 // pred_check
    _
  $region7: #{rnn_forward.1} parent=0 // pred_check_branch
    %12 = sbr.rel (0) target = $region9
  $region8: #{rnn_forward.1} parent=0 // pred_region
    _
  $region9: #{rnn_forward.1} parent=0 // pred_fallthru
    _
  // Predicated region
  $region10: #{rnn_forward.1} parent=0 // pred_check
    _
  $region11: #{rnn_forward.1} parent=0 // pred_check_branch
    %14 = sbr.rel (0) target = $region13
  $region12: #{rnn_forward.1} parent=0 // pred_region
    _
  $region13: #{rnn_forward.1} parent=0 // pred_fallthru
    _
  // Predicated region
  $region14: #{rnn_forward.1} parent=0 // pred_check
    _
  $region15: #{rnn_forward.1} parent=0 // pred_check_branch
    %16 = sbr.rel (0) target = $region17
  $region16: #{rnn_forward.1} parent=0 // pred_region
    _
  $region17: #{rnn_forward.1} parent=0 // pred_fallthru
    _
  %p18 = scmp.eq.s32.totalorder 0, 0
  // Predicated region
  $region18: #{rnn_forward.1} parent=0 // pred_check
    %p19 = pneg %p18
  $region19: #{rnn_forward.1} parent=0 // pred_check_branch
    %21 = sbr.rel (%p19) target = $region21
  $region20: #{rnn_forward.1} parent=0 // pred_region
    %22 = vst [vmem:[#allocation2] sm:$0xff] 0.0
  $region21: #{rnn_forward.1} parent=0 // pred_fallthru
    _
  %v23 = vld [vmem:[%s1] sm:$0xf]
  %v24 = vld [vmem:[%s1 + $0x4] sm:$0xf]
  %v25 = vld [vmem:[%s1 + $0x8] sm:$0xf]
  %v26 = vld [vmem:[%s1 + $0xc] sm:$0xf]
  %v27 = vld [vmem:[%s1 + $0x10] sm:$0xf]
  %v28 = vld [vmem:[%s1 + $0x14] sm:$0xf]
  %v29 = vld [vmem:[%s1 + $0x18] sm:$0xf]
  %v30 = vld [vmem:[%s1 + $0x1c] sm:$0xf]
  %v31 = vld [vmem:[%s1 + $0x20] sm:$0xf]
  %v32 = vld [vmem:[%s1 + $0x24] sm:$0xf]
  %v33 = vld [vmem:[%s1 + $0x28] sm:$0xf]
  %v34 = vld [vmem:[%s1 + $0x2c] sm:$0xf]
  %v35 = vld [vmem:[%s1 + $0x30] sm:$0xf]
  %v36 = vld [vmem:[%s1 + $0x34] sm:$0xf]
  %v37 = vld [vmem:[%s1 + $0x38] sm:$0xf]
  %v38 = vld [vmem:[%s1 + $0x3c] sm:$0xf]
  %v39 = vld [vmem:[#allocation2] sm:$0xff]
  %v40 = vld [vmem:[%s0] sm:$0xf]
  %v41 = vunpack.c.l.bf16 %v40
  %v42 = vpack.c.bf16 %v39, %v39
  %v59 = vunpack.c.l.b16 %v23
  %v60 = vunpack.c.l.b16 %v24
  %v61 = vunpack.c.l.b16 %v25
  %v62 = vunpack.c.l.b16 %v26
  %v63 = vunpack.c.l.b16 %v27
  %v64 = vunpack.c.l.b16 %v28
  %v65 = vunpack.c.l.b16 %v29
  %v66 = vunpack.c.l.b16 %v30
  %v67 = vunpack.c.l.b16 %v31
  %v68 = vunpack.c.l.b16 %v32
  %v69 = vunpack.c.l.b16 %v33
  %v70 = vunpack.c.l.b16 %v34
  %v71 = vunpack.c.l.b16 %v35
  %v72 = vunpack.c.l.b16 %v36
  %v73 = vunpack.c.l.b16 %v37
  %v74 = vunpack.c.l.b16 %v38
  %v75 = vpack.c.b16 %v60, %v59
  %v76 = vpack.c.b16 %v62, %v61
  %v77 = vpack.c.b16 %v64, %v63
  %v78 = vpack.c.b16 %v66, %v65
  %v79 = vpack.c.b16 %v68, %v67
  %v80 = vpack.c.b16 %v70, %v69
  %v81 = vpack.c.b16 %v72, %v71
  %v82 = vpack.c.b16 %v74, %v73
  %91 = vmatprep.subr.bf16.mxu0 0
  %92 = vmatpush1.bf16.msra.mxu0 %v75
  %93 = vmatprep.subr.bf16.mxu0 0
  %94 = vmatpush1.bf16.msra.mxu0 %v76
  %95 = vmatprep.subr.bf16.mxu0 0
  %96 = vmatpush1.bf16.msra.mxu0 %v77
  %97 = vmatprep.subr.bf16.mxu0 0
  %98 = vmatpush1.bf16.msra.mxu0 %v78
  %99 = vmatprep.subr.bf16.mxu0 0
  %100 = vmatpush1.bf16.msra.mxu0 %v79
  %101 = vmatprep.subr.bf16.mxu0 0
  %102 = vmatpush1.bf16.msra.mxu0 %v80
  %103 = vmatprep.subr.bf16.mxu0 0
  %104 = vmatpush1.bf16.msra.mxu0 %v81
  %105 = vmatprep.subr.bf16.mxu0 0
  %106 = vmatpush1.bf16.msra.mxu0 %v82
  %107 = vmatprep.subr.bf16.mxu0 0
  %108 = vmatpush1.bf16.msra.mxu0 0
  %109 = vmatprep.subr.bf16.mxu0 0
  %110 = vmatpush1.bf16.msra.mxu0 0
  %111 = vmatprep.subr.bf16.mxu0 0
  %112 = vmatpush1.bf16.msra.mxu0 0
  %113 = vmatprep.subr.bf16.mxu0 0
  %114 = vmatpush1.bf16.msra.mxu0 0
  %115 = vmatprep.subr.bf16.mxu0 0
  %116 = vmatpush1.bf16.msra.mxu0 0
  %117 = vmatprep.subr.bf16.mxu0 0
  %118 = vmatpush1.bf16.msra.mxu0 0
  %119 = vmatprep.subr.bf16.mxu0 0
  %120 = vmatpush1.bf16.msra.mxu0 0
  %121 = vmatprep.subr.bf16.mxu0 0
  %122 = vmatpush1.bf16.msra.mxu0 0
  %123 = vmatprep.mubr.bf16.mxu0 0
  %124 = vmatmul.mubr.bf16.gmra.mrb[0].mxu0 %v42
  %v125 = vpop.f32.mrb[0].mxu0
  %v126 = vadd.f32 0.0, %v125
  %v127 = vpop.f32.mrb[0].mxu0
  %v128 = vpop.f32.mrb[0].mxu0
  %v129 = vpop.f32.mrb[0].mxu0
  %130 = vdwg.mxu0
  %v131 = vadd.f32 %v41, %v126
  %v132 = vtanh.pop %v131
  %s133 = scalar_lea.vmem %s0, 4
  %v134 = vld [vmem:[%s133] sm:$0xf]
  %v135 = vunpack.c.l.bf16 %v134
  %v136 = vpack.c.bf16 %v132, %v132
  %137 = vmatprep.subr.bf16.mxu0 0
  %138 = vmatpush1.bf16.msra.mxu0 %v75
  %139 = vmatprep.subr.bf16.mxu0 0
  %140 = vmatpush1.bf16.msra.mxu0 %v76
  %141 = vmatprep.subr.bf16.mxu0 0
  %142 = vmatpush1.bf16.msra.mxu0 %v77
  %143 = vmatprep.subr.bf16.mxu0 0
  %144 = vmatpush1.bf16.msra.mxu0 %v78
  %145 = vmatprep.subr.bf16.mxu0 0
  %146 = vmatpush1.bf16.msra.mxu0 %v79
  %147 = vmatprep.subr.bf16.mxu0 0
  %148 = vmatpush1.bf16.msra.mxu0 %v80
  %149 = vmatprep.subr.bf16.mxu0 0
  %150 = vmatpush1.bf16.msra.mxu0 %v81
  %151 = vmatprep.subr.bf16.mxu0 0
  %152 = vmatpush1.bf16.msra.mxu0 %v82
  %153 = vmatprep.subr.bf16.mxu0 0
  %154 = vmatpush1.bf16.msra.mxu0 0
  %155 = vmatprep.subr.bf16.mxu0 0
  %156 = vmatpush1.bf16.msra.mxu0 0
  %157 = vmatprep.subr.bf16.mxu0 0
  %158 = vmatpush1.bf16.msra.mxu0 0
  %159 = vmatprep.subr.bf16.mxu0 0
  %160 = vmatpush1.bf16.msra.mxu0 0
  %161 = vmatprep.subr.bf16.mxu0 0
  %162 = vmatpush1.bf16.msra.mxu0 0
  %163 = vmatprep.subr.bf16.mxu0 0
  %164 = vmatpush1.bf16.msra.mxu0 0
  %165 = vmatprep.subr.bf16.mxu0 0
  %166 = vmatpush1.bf16.msra.mxu0 0
  %167 = vmatprep.subr.bf16.mxu0 0
  %168 = vmatpush1.bf16.msra.mxu0 0
  %169 = vmatprep.mubr.bf16.mxu0 0
  %170 = vmatmul.mubr.bf16.gmra.mrb[0].mxu0 %v136
  %v171 = vpop.f32.mrb[0].mxu0
  %v172 = vadd.f32 0.0, %v171
  %v173 = vpop.f32.mrb[0].mxu0
  %v174 = vpop.f32.mrb[0].mxu0
  %v175 = vpop.f32.mrb[0].mxu0
  %176 = vdwg.mxu0
  %v177 = vadd.f32 %v135, %v172
  %v178 = vtanh.pop %v177
  %s179 = scalar_lea.vmem %s0, 8
  %v180 = vld [vmem:[%s179] sm:$0xf]
  %v181 = vunpack.c.l.bf16 %v180
  %v182 = vpack.c.bf16 %v178, %v178
  %183 = vmatprep.subr.bf16.mxu0 0
  %184 = vmatpush1.bf16.msra.mxu0 %v75
  %185 = vmatprep.subr.bf16.mxu0 0
  %186 = vmatpush1.bf16.msra.mxu0 %v76
  %187 = vmatprep.subr.bf16.mxu0 0
  %188 = vmatpush1.bf16.msra.mxu0 %v77
  %189 = vmatprep.subr.bf16.mxu0 0
  %190 = vmatpush1.bf16.msra.mxu0 %v78
  %191 = vmatprep.subr.bf16.mxu0 0
  %192 = vmatpush1.bf16.msra.mxu0 %v79
  %193 = vmatprep.subr.bf16.mxu0 0
  %194 = vmatpush1.bf16.msra.mxu0 %v80
  %195 = vmatprep.subr.bf16.mxu0 0
  %196 = vmatpush1.bf16.msra.mxu0 %v81
  %197 = vmatprep.subr.bf16.mxu0 0
  %198 = vmatpush1.bf16.msra.mxu0 %v82
  %199 = vmatprep.subr.bf16.mxu0 0
  %200 = vmatpush1.bf16.msra.mxu0 0
  %201 = vmatprep.subr.bf16.mxu0 0
  %202 = vmatpush1.bf16.msra.mxu0 0
  %203 = vmatprep.subr.bf16.mxu0 0
  %204 = vmatpush1.bf16.msra.mxu0 0
  %205 = vmatprep.subr.bf16.mxu0 0
  %206 = vmatpush1.bf16.msra.mxu0 0
  %207 = vmatprep.subr.bf16.mxu0 0
  %208 = vmatpush1.bf16.msra.mxu0 0
  %209 = vmatprep.subr.bf16.mxu0 0
  %210 = vmatpush1.bf16.msra.mxu0 0
  %211 = vmatprep.subr.bf16.mxu0 0
  %212 = vmatpush1.bf16.msra.mxu0 0
  %213 = vmatprep.subr.bf16.mxu0 0
  %214 = vmatpush1.bf16.msra.mxu0 0
  %215 = vmatprep.mubr.bf16.mxu0 0
  %216 = vmatmul.mubr.bf16.gmra.mrb[0].mxu0 %v182
  %v217 = vpop.f32.mrb[0].mxu0
  %v218 = vadd.f32 0.0, %v217
  %v219 = vpop.f32.mrb[0].mxu0
  %v220 = vpop.f32.mrb[0].mxu0
  %v221 = vpop.f32.mrb[0].mxu0
  %222 = vdwg.mxu0
  %v223 = vadd.f32 %v181, %v218
  %v224 = vtanh.pop %v223
  %s225 = scalar_lea.vmem %s0, 12
  %v226 = vld [vmem:[%s225] sm:$0xf]
  %v227 = vunpack.c.l.bf16 %v226
  %v228 = vpack.c.bf16 %v224, %v224
  %229 = vmatprep.subr.bf16.mxu0 0
  %230 = vmatpush1.bf16.msra.mxu0 %v75
  %231 = vmatprep.subr.bf16.mxu0 0
  %232 = vmatpush1.bf16.msra.mxu0 %v76
  %233 = vmatprep.subr.bf16.mxu0 0
  %234 = vmatpush1.bf16.msra.mxu0 %v77
  %235 = vmatprep.subr.bf16.mxu0 0
  %236 = vmatpush1.bf16.msra.mxu0 %v78
  %237 = vmatprep.subr.bf16.mxu0 0
  %238 = vmatpush1.bf16.msra.mxu0 %v79
  %239 = vmatprep.subr.bf16.mxu0 0
  %240 = vmatpush1.bf16.msra.mxu0 %v80
  %241 = vmatprep.subr.bf16.mxu0 0
  %242 = vmatpush1.bf16.msra.mxu0 %v81
  %243 = vmatprep.subr.bf16.mxu0 0
  %244 = vmatpush1.bf16.msra.mxu0 %v82
  %245 = vmatprep.subr.bf16.mxu0 0
  %246 = vmatpush1.bf16.msra.mxu0 0
  %247 = vmatprep.subr.bf16.mxu0 0
  %248 = vmatpush1.bf16.msra.mxu0 0
  %249 = vmatprep.subr.bf16.mxu0 0
  %250 = vmatpush1.bf16.msra.mxu0 0
  %251 = vmatprep.subr.bf16.mxu0 0
  %252 = vmatpush1.bf16.msra.mxu0 0
  %253 = vmatprep.subr.bf16.mxu0 0
  %254 = vmatpush1.bf16.msra.mxu0 0
  %255 = vmatprep.subr.bf16.mxu0 0
  %256 = vmatpush1.bf16.msra.mxu0 0
  %257 = vmatprep.subr.bf16.mxu0 0
  %258 = vmatpush1.bf16.msra.mxu0 0
  %259 = vmatprep.subr.bf16.mxu0 0
  %260 = vmatpush1.bf16.msra.mxu0 0
  %261 = vmatprep.mubr.bf16.mxu0 0
  %262 = vmatmul.mubr.bf16.gmra.mrb[0].mxu0 %v228
  %v263 = vpop.f32.mrb[0].mxu0
  %v264 = vadd.f32 0.0, %v263
  %v265 = vpop.f32.mrb[0].mxu0
  %v266 = vpop.f32.mrb[0].mxu0
  %v267 = vpop.f32.mrb[0].mxu0
  %268 = vdwg.mxu0
  %v269 = vadd.f32 %v227, %v264
  %v270 = vtanh.pop %v269
  %s271 = scalar_lea.vmem %s0, 16
  %v272 = vld [vmem:[%s271] sm:$0xf]
  %v273 = vunpack.c.l.bf16 %v272
  %v274 = vpack.c.bf16 %v270, %v270
  %275 = vmatprep.subr.bf16.mxu0 0
  %276 = vmatpush1.bf16.msra.mxu0 %v75
  %277 = vmatprep.subr.bf16.mxu0 0
  %278 = vmatpush1.bf16.msra.mxu0 %v76
  %279 = vmatprep.subr.bf16.mxu0 0
  %280 = vmatpush1.bf16.msra.mxu0 %v77
  %281 = vmatprep.subr.bf16.mxu0 0
  %282 = vmatpush1.bf16.msra.mxu0 %v78
  %283 = vmatprep.subr.bf16.mxu0 0
  %284 = vmatpush1.bf16.msra.mxu0 %v79
  %285 = vmatprep.subr.bf16.mxu0 0
  %286 = vmatpush1.bf16.msra.mxu0 %v80
  %287 = vmatprep.subr.bf16.mxu0 0
  %288 = vmatpush1.bf16.msra.mxu0 %v81
  %289 = vmatprep.subr.bf16.mxu0 0
  %290 = vmatpush1.bf16.msra.mxu0 %v82
  %291 = vmatprep.subr.bf16.mxu0 0
  %292 = vmatpush1.bf16.msra.mxu0 0
  %293 = vmatprep.subr.bf16.mxu0 0
  %294 = vmatpush1.bf16.msra.mxu0 0
  %295 = vmatprep.subr.bf16.mxu0 0
  %296 = vmatpush1.bf16.msra.mxu0 0
  %297 = vmatprep.subr.bf16.mxu0 0
  %298 = vmatpush1.bf16.msra.mxu0 0
  %299 = vmatprep.subr.bf16.mxu0 0
  %300 = vmatpush1.bf16.msra.mxu0 0
  %301 = vmatprep.subr.bf16.mxu0 0
  %302 = vmatpush1.bf16.msra.mxu0 0
  %303 = vmatprep.subr.bf16.mxu0 0
  %304 = vmatpush1.bf16.msra.mxu0 0
  %305 = vmatprep.subr.bf16.mxu0 0
  %306 = vmatpush1.bf16.msra.mxu0 0
  %307 = vmatprep.mubr.bf16.mxu0 0
  %308 = vmatmul.mubr.bf16.gmra.mrb[0].mxu0 %v274
  %v309 = vpop.f32.mrb[0].mxu0
  %v310 = vadd.f32 0.0, %v309
  %v311 = vpop.f32.mrb[0].mxu0
  %v312 = vpop.f32.mrb[0].mxu0
  %v313 = vpop.f32.mrb[0].mxu0
  %314 = vdwg.mxu0
  %v315 = vadd.f32 %v273, %v310
  %v316 = vtanh.pop %v315
  %s317 = scalar_lea.vmem %s0, 20
  %v318 = vld [vmem:[%s317] sm:$0xf]
  %v319 = vunpack.c.l.bf16 %v318
  %v320 = vpack.c.bf16 %v316, %v316
  %321 = vmatprep.subr.bf16.mxu0 0
  %322 = vmatpush1.bf16.msra.mxu0 %v75
  %323 = vmatprep.subr.bf16.mxu0 0
  %324 = vmatpush1.bf16.msra.mxu0 %v76
  %325 = vmatprep.subr.bf16.mxu0 0
  %326 = vmatpush1.bf16.msra.mxu0 %v77
  %327 = vmatprep.subr.bf16.mxu0 0
  %328 = vmatpush1.bf16.msra.mxu0 %v78
  %329 = vmatprep.subr.bf16.mxu0 0
  %330 = vmatpush1.bf16.msra.mxu0 %v79
  %331 = vmatprep.subr.bf16.mxu0 0
  %332 = vmatpush1.bf16.msra.mxu0 %v80
  %333 = vmatprep.subr.bf16.mxu0 0
  %334 = vmatpush1.bf16.msra.mxu0 %v81
  %335 = vmatprep.subr.bf16.mxu0 0
  %336 = vmatpush1.bf16.msra.mxu0 %v82
  %337 = vmatprep.subr.bf16.mxu0 0
  %338 = vmatpush1.bf16.msra.mxu0 0
  %339 = vmatprep.subr.bf16.mxu0 0
  %340 = vmatpush1.bf16.msra.mxu0 0
  %341 = vmatprep.subr.bf16.mxu0 0
  %342 = vmatpush1.bf16.msra.mxu0 0
  %343 = vmatprep.subr.bf16.mxu0 0
  %344 = vmatpush1.bf16.msra.mxu0 0
  %345 = vmatprep.subr.bf16.mxu0 0
  %346 = vmatpush1.bf16.msra.mxu0 0
  %347 = vmatprep.subr.bf16.mxu0 0
  %348 = vmatpush1.bf16.msra.mxu0 0
  %349 = vmatprep.subr.bf16.mxu0 0
  %350 = vmatpush1.bf16.msra.mxu0 0
  %351 = vmatprep.subr.bf16.mxu0 0
  %352 = vmatpush1.bf16.msra.mxu0 0
  %353 = vmatprep.mubr.bf16.mxu0 0
  %354 = vmatmul.mubr.bf16.gmra.mrb[0].mxu0 %v320
  %v355 = vpop.f32.mrb[0].mxu0
  %v356 = vadd.f32 0.0, %v355
  %v357 = vpop.f32.mrb[0].mxu0
  %v358 = vpop.f32.mrb[0].mxu0
  %v359 = vpop.f32.mrb[0].mxu0
  %360 = vdwg.mxu0
  %v361 = vadd.f32 %v319, %v356
  %v362 = vtanh.pop %v361
  %s363 = scalar_lea.vmem %s0, 24
  %v364 = vld [vmem:[%s363] sm:$0xf]
  %v365 = vunpack.c.l.bf16 %v364
  %v366 = vpack.c.bf16 %v362, %v362
  %367 = vmatprep.subr.bf16.mxu0 0
  %368 = vmatpush1.bf16.msra.mxu0 %v75
  %369 = vmatprep.subr.bf16.mxu0 0
  %370 = vmatpush1.bf16.msra.mxu0 %v76
  %371 = vmatprep.subr.bf16.mxu0 0
  %372 = vmatpush1.bf16.msra.mxu0 %v77
  %373 = vmatprep.subr.bf16.mxu0 0
  %374 = vmatpush1.bf16.msra.mxu0 %v78
  %375 = vmatprep.subr.bf16.mxu0 0
  %376 = vmatpush1.bf16.msra.mxu0 %v79
  %377 = vmatprep.subr.bf16.mxu0 0
  %378 = vmatpush1.bf16.msra.mxu0 %v80
  %379 = vmatprep.subr.bf16.mxu0 0
  %380 = vmatpush1.bf16.msra.mxu0 %v81
  %381 = vmatprep.subr.bf16.mxu0 0
  %382 = vmatpush1.bf16.msra.mxu0 %v82
  %383 = vmatprep.subr.bf16.mxu0 0
  %384 = vmatpush1.bf16.msra.mxu0 0
  %385 = vmatprep.subr.bf16.mxu0 0
  %386 = vmatpush1.bf16.msra.mxu0 0
  %387 = vmatprep.subr.bf16.mxu0 0
  %388 = vmatpush1.bf16.msra.mxu0 0
  %389 = vmatprep.subr.bf16.mxu0 0
  %390 = vmatpush1.bf16.msra.mxu0 0
  %391 = vmatprep.subr.bf16.mxu0 0
  %392 = vmatpush1.bf16.msra.mxu0 0
  %393 = vmatprep.subr.bf16.mxu0 0
  %394 = vmatpush1.bf16.msra.mxu0 0
  %395 = vmatprep.subr.bf16.mxu0 0
  %396 = vmatpush1.bf16.msra.mxu0 0
  %397 = vmatprep.subr.bf16.mxu0 0
  %398 = vmatpush1.bf16.msra.mxu0 0
  %399 = vmatprep.mubr.bf16.mxu0 0
  %400 = vmatmul.mubr.bf16.gmra.mrb[0].mxu0 %v366
  %v401 = vpop.f32.mrb[0].mxu0
  %v402 = vadd.f32 0.0, %v401
  %v403 = vpop.f32.mrb[0].mxu0
  %v404 = vpop.f32.mrb[0].mxu0
  %v405 = vpop.f32.mrb[0].mxu0
  %406 = vdwg.mxu0
  %v407 = vadd.f32 %v365, %v402
  %v408 = vtanh.pop %v407
  %s409 = scalar_lea.vmem %s0, 28
  %v410 = vld [vmem:[%s409] sm:$0xf]
  %v411 = vunpack.c.l.bf16 %v410
  %v412 = vpack.c.bf16 %v408, %v408
  %413 = vmatprep.subr.bf16.mxu0 0
  %414 = vmatpush1.bf16.msra.mxu0 %v75
  %415 = vmatprep.subr.bf16.mxu0 0
  %416 = vmatpush1.bf16.msra.mxu0 %v76
  %417 = vmatprep.subr.bf16.mxu0 0
  %418 = vmatpush1.bf16.msra.mxu0 %v77
  %419 = vmatprep.subr.bf16.mxu0 0
  %420 = vmatpush1.bf16.msra.mxu0 %v78
  %421 = vmatprep.subr.bf16.mxu0 0
  %422 = vmatpush1.bf16.msra.mxu0 %v79
  %423 = vmatprep.subr.bf16.mxu0 0
  %424 = vmatpush1.bf16.msra.mxu0 %v80
  %425 = vmatprep.subr.bf16.mxu0 0
  %426 = vmatpush1.bf16.msra.mxu0 %v81
  %427 = vmatprep.subr.bf16.mxu0 0
  %428 = vmatpush1.bf16.msra.mxu0 %v82
  %429 = vmatprep.subr.bf16.mxu0 0
  %430 = vmatpush1.bf16.msra.mxu0 0
  %431 = vmatprep.subr.bf16.mxu0 0
  %432 = vmatpush1.bf16.msra.mxu0 0
  %433 = vmatprep.subr.bf16.mxu0 0
  %434 = vmatpush1.bf16.msra.mxu0 0
  %435 = vmatprep.subr.bf16.mxu0 0
  %436 = vmatpush1.bf16.msra.mxu0 0
  %437 = vmatprep.subr.bf16.mxu0 0
  %438 = vmatpush1.bf16.msra.mxu0 0
  %439 = vmatprep.subr.bf16.mxu0 0
  %440 = vmatpush1.bf16.msra.mxu0 0
  %441 = vmatprep.subr.bf16.mxu0 0
  %442 = vmatpush1.bf16.msra.mxu0 0
  %443 = vmatprep.subr.bf16.mxu0 0
  %444 = vmatpush1.bf16.msra.mxu0 0
  %445 = vmatprep.mubr.bf16.mxu0 0
  %446 = vmatmul.mubr.bf16.gmra.mrb[0].mxu0 %v412
  %v447 = vpop.f32.mrb[0].mxu0
  %v448 = vadd.f32 0.0, %v447
  %v449 = vpop.f32.mrb[0].mxu0
  %v450 = vpop.f32.mrb[0].mxu0
  %v451 = vpop.f32.mrb[0].mxu0
  %452 = vdwg.mxu0
  %v453 = vadd.f32 %v411, %v448
  %v454 = vtanh.pop %v453
  %455 = vst [vmem:[#allocation2] sm:$0xff] %v454
  // Predicated region
  $region22: #{rnn_forward.1} parent=0 // pred_check
    %p456 = pneg %p18
  $region23: #{rnn_forward.1} parent=0 // pred_check_branch
    %458 = sbr.rel (%p456) target = $region25
  $region24: #{rnn_forward.1} parent=0 // pred_region
    %v459 = vld [vmem:[#allocation2] sm:$0xff]
    %v460 = vpack.c.bf16 %v459, %v459
    %v461 = vld [vmem:[%s2] sm:$0xf]
    %v462 = vld [vmem:[%s2 + $0x4] sm:$0xf]
    %v463 = vld [vmem:[%s2 + $0x8] sm:$0xf]
    %v464 = vld [vmem:[%s2 + $0xc] sm:$0xf]
    %v465 = vld [vmem:[%s2 + $0x10] sm:$0xf]
    %v466 = vld [vmem:[%s2 + $0x14] sm:$0xf]
    %v467 = vld [vmem:[%s2 + $0x18] sm:$0xf]
    %v468 = vld [vmem:[%s2 + $0x1c] sm:$0xf]
    %v469 = vld [vmem:[%s2 + $0x20] sm:$0xf]
    %v470 = vld [vmem:[%s2 + $0x24] sm:$0xf]
    %v471 = vld [vmem:[%s2 + $0x28] sm:$0xf]
    %v472 = vld [vmem:[%s2 + $0x2c] sm:$0xf]
    %v473 = vld [vmem:[%s2 + $0x30] sm:$0xf]
    %v474 = vld [vmem:[%s2 + $0x34] sm:$0xf]
    %v475 = vld [vmem:[%s2 + $0x38] sm:$0xf]
    %v476 = vld [vmem:[%s2 + $0x3c] sm:$0xf]
    %v477 = vld [vmem:[%s3] sm:$0x1]
    %v479 = vlaneseq
    %v480 = vshrl.u32 %v479, 7
    %v481 = vsub.s32 0, %v480
    %v482 = vrot.slane %v477, %v481
    %v500 = vunpack.c.l.b16 %v461
    %v501 = vunpack.c.l.b16 %v462
    %v502 = vunpack.c.l.b16 %v463
    %v503 = vunpack.c.l.b16 %v464
    %v504 = vunpack.c.l.b16 %v465
    %v505 = vunpack.c.l.b16 %v466
    %v506 = vunpack.c.l.b16 %v467
    %v507 = vunpack.c.l.b16 %v468
    %v508 = vunpack.c.l.b16 %v469
    %v509 = vunpack.c.l.b16 %v470
    %v510 = vunpack.c.l.b16 %v471
    %v511 = vunpack.c.l.b16 %v472
    %v512 = vunpack.c.l.b16 %v473
    %v513 = vunpack.c.l.b16 %v474
    %v514 = vunpack.c.l.b16 %v475
    %v515 = vunpack.c.l.b16 %v476
    %v516 = vpack.c.b16 %v501, %v500
    %v517 = vpack.c.b16 %v503, %v502
    %v518 = vpack.c.b16 %v505, %v504
    %v519 = vpack.c.b16 %v507, %v506
    %v520 = vpack.c.b16 %v509, %v508
    %v521 = vpack.c.b16 %v511, %v510
    %v522 = vpack.c.b16 %v513, %v512
    %v523 = vpack.c.b16 %v515, %v514
    %532 = vmatprep.subr.bf16.mxu0 0
    %533 = vmatpush1.bf16.msra.mxu0 %v516
    %534 = vmatprep.subr.bf16.mxu0 0
    %535 = vmatpush1.bf16.msra.mxu0 %v517
    %536 = vmatprep.subr.bf16.mxu0 0
    %537 = vmatpush1.bf16.msra.mxu0 %v518
    %538 = vmatprep.subr.bf16.mxu0 0
    %539 = vmatpush1.bf16.msra.mxu0 %v519
    %540 = vmatprep.subr.bf16.mxu0 0
    %541 = vmatpush1.bf16.msra.mxu0 %v520
    %542 = vmatprep.subr.bf16.mxu0 0
    %543 = vmatpush1.bf16.msra.mxu0 %v521
    %544 = vmatprep.subr.bf16.mxu0 0
    %545 = vmatpush1.bf16.msra.mxu0 %v522
    %546 = vmatprep.subr.bf16.mxu0 0
    %547 = vmatpush1.bf16.msra.mxu0 %v523
    %548 = vmatprep.subr.bf16.mxu0 0
    %549 = vmatpush1.bf16.msra.mxu0 0
    %550 = vmatprep.subr.bf16.mxu0 0
    %551 = vmatpush1.bf16.msra.mxu0 0
    %552 = vmatprep.subr.bf16.mxu0 0
    %553 = vmatpush1.bf16.msra.mxu0 0
    %554 = vmatprep.subr.bf16.mxu0 0
    %555 = vmatpush1.bf16.msra.mxu0 0
    %556 = vmatprep.subr.bf16.mxu0 0
    %557 = vmatpush1.bf16.msra.mxu0 0
    %558 = vmatprep.subr.bf16.mxu0 0
    %559 = vmatpush1.bf16.msra.mxu0 0
    %560 = vmatprep.subr.bf16.mxu0 0
    %561 = vmatpush1.bf16.msra.mxu0 0
    %562 = vmatprep.subr.bf16.mxu0 0
    %563 = vmatpush1.bf16.msra.mxu0 0
    %564 = vmatprep.mubr.bf16.mxu0 0
    %565 = vmatmul.mubr.bf16.gmra.mrb[0].mxu0 %v460
    %v566 = vpop.f32.mrb[0].mxu0
    %v567 = vadd.f32 %v482, %v566
    %v568 = vpop.f32.mrb[0].mxu0
    %v569 = vpop.f32.mrb[0].mxu0
    %v570 = vpop.f32.mrb[0].mxu0
    %571 = vdwg.mxu0
    %572 = vst [vmem:[%s4] sm:$0xff] %v567
  $region25: #{rnn_forward.1} parent=0 // pred_fallthru
    _
  // Predicated region
  $region26: #{rnn_forward.1} parent=0 // pred_check
    _
  $region27: #{rnn_forward.1} parent=0 // pred_check_branch
    %574 = sbr.rel (0) target = $region29
  $region28: #{rnn_forward.1} parent=0 // pred_region
    _
  $region29: #{rnn_forward.1} parent=0 // pred_fallthru
    _
  // Predicated region
  $region30: #{rnn_forward.1} parent=0 // pred_check
    _
  $region31: #{rnn_forward.1} parent=0 // pred_check_branch
    %576 = sbr.rel (0) target = $region33
  $region32: #{rnn_forward.1} parent=0 // pred_region
    _
  $region33: #{rnn_forward.1} parent=0 // pred_fallthru
    _

</llo_original>
